<compile_context>
chip_gen: v7x
topology: tpu7x:2x2x1
jax: 0.10.0
libtpu: 0.0.40
codegen_flags: <defaults>
</compile_context>

<pallas_src>
import jax
import jax.numpy as jnp
import numpy as np
from jax.experimental import pallas as pl
from jax.experimental.pallas import tpu as pltpu

B = 8                   # batch (demo size)
I = 16                  # input_size
H = 32                  # hidden_size
D = 2                   # bidirectional
NUM_LAYERS = 2
G3 = 3 * D * H          # 192 packed gate columns [i_f|i_b | g_f|g_b | o_f|o_b]
GPAD = 256              # lane width of every row in the parameter slab
EPS_BN = 1e-5
EPS_LN = 1e-5

# Parameter-slab row layout (all rows are GPAD = 256 lanes, f32):
#   rows 0:16   layer-0 fused gate weights (Linear+BN folded in), (I, 192)
#   rows 16:80  layer-1 gate weights, (2H, 192)
#   row  80     layer-0 fused gate bias (192)
#   row  81     layer-1 gate bias (192)
#   row  82/83  LayerNorm gamma / beta (64)
#   row  84/85  fc weight (64) / fc bias (1)
#   rows 86:88  zero padding (rows multiple of 8)
W1_ROW = I
B0_ROW = I + D * H       # 80
B1_ROW = B0_ROW + 1
LN_G_ROW = B0_ROW + 2
LN_B_ROW = B0_ROW + 3
FC_W_ROW = B0_ROW + 4
FC_B_ROW = B0_ROW + 5
PARAM_ROWS = 88


def _fused_lstm_layer(x_bf16, w_bf16, b, is_g):
    """One bidirectional LSTM step (T=1, h0=c0=0), both directions fused.

    x_bf16: (B, in_dim) bf16; w_bf16: (in_dim, 256) bf16 with columns
    [i_f|i_b | g_f|g_b | o_f|o_b | zero-pad]; b: (1, 256) f32 combined bias.
    Returns (B, 2H) f32 = [h_fwd | h_bwd] (already the torch concat order).
    """
    z = jnp.dot(x_bf16, w_bf16, preferred_element_type=jnp.float32) + b
    # sigmoid(z) = 0.5*(tanh(z/2) + 1): one tanh pass over the whole tile on
    # the EUP; the sigmoid/tanh distinction is a cheap VPU select.
    t = jnp.tanh(jnp.where(is_g, z, 0.5 * z))
    act = jnp.where(is_g, t, 0.5 * (t + 1.0))
    i = act[:, 0:D * H]
    g = act[:, D * H:2 * D * H]
    o = act[:, 2 * D * H:3 * D * H]
    # h0 == 0 kills the W_hh matmuls; c0 == 0 kills the forget gate: c = i*g.
    return o * jnp.tanh(i * g)                                   # (B, 2H)


def lstm_model_kernel(x_ref, p_ref, out_ref):
    # bf16 MXU operands (f32 accumulate): single native MXU pass per matmul.
    w0 = p_ref[0:I, :].astype(jnp.bfloat16)                      # (16, 256)
    w1 = p_ref[W1_ROW:W1_ROW + D * H, :].astype(jnp.bfloat16)    # (64, 256)

    # Gate mask built once and shared by both layers (no CSE of iota in JAX).
    lane = jax.lax.broadcasted_iota(jnp.int32, (x_ref.shape[0], GPAD), 1)
    is_g = (lane >= D * H) & (lane < 2 * D * H)

    # Layer 0 (Linear + eval-BN folded into its gates host-side), then layer 1.
    h = _fused_lstm_layer(x_ref[...].astype(jnp.bfloat16), w0,
                          p_ref[B0_ROW:B0_ROW + 1, :], is_g)
    h = _fused_lstm_layer(h.astype(jnp.bfloat16), w1,
                          p_ref[B1_ROW:B1_ROW + 1, :], is_g)

    # LayerNorm over the 2H features.
    mu = jnp.mean(h, axis=-1, keepdims=True)
    var = jnp.mean((h - mu) * (h - mu), axis=-1, keepdims=True)
    h = (h - mu) * jax.lax.rsqrt(var + EPS_LN)
    h = (h * p_ref[LN_G_ROW:LN_G_ROW + 1, 0:D * H]
         + p_ref[LN_B_ROW:LN_B_ROW + 1, 0:D * H])

    # Dropout is identity in eval; activation = ReLU.
    h = jnp.maximum(h, 0.0)

    # fc (2H -> 1): VPU multiply + lane reduce (a 1-column MXU dot wastes the
    # result lanes and pays push/pop latency).
    prod = h * p_ref[FC_W_ROW:FC_W_ROW + 1, 0:D * H]
    out_ref[...] = (jnp.sum(prod, axis=-1, keepdims=True)
                    + p_ref[FC_B_ROW:FC_B_ROW + 1, 0:1])


def lstm_model_forward(x, params, block_b=None):
    """Run the fused forward pass. Batch is exposed as a 'parallel' grid axis
    so batches larger than one block shard across TensorCores (v7x)."""
    bn = x.shape[0]
    if block_b is None:
        block_b = bn if bn <= 128 else 128
    grid = (pl.cdiv(bn, block_b),)
    return pl.pallas_call(
        lstm_model_kernel,
        out_shape=jax.ShapeDtypeStruct((bn, 1), jnp.float32),
        grid_spec=pltpu.PrefetchScalarGridSpec(
            num_scalar_prefetch=0,
            grid=grid,
            in_specs=[
                pl.BlockSpec((block_b, I), lambda b: (b, 0)),
                # constant index map -> parameter slab stays resident in VMEM
                pl.BlockSpec((PARAM_ROWS, GPAD), lambda b: (0, 0)),
            ],
            out_specs=pl.BlockSpec((block_b, 1), lambda b: (b, 0)),
        ),
        compiler_params=pltpu.CompilerParams(
            dimension_semantics=("parallel",)),
    )(x, params)


# ----------------------------------------------------------------------------
# Parameters: PyTorch-faithful synthetic params + host-side packing.
# ----------------------------------------------------------------------------
def init_params(key):
    """Synthetic parameters mirroring the PyTorch module layout (eval mode).

    LSTM weights are stored transposed (in_features, 4H), gate order [i|f|g|o].
    """
    keys = iter(jax.random.split(key, 40))

    def u(shape, fan_in):
        bound = 1.0 / np.sqrt(fan_in)
        return jax.random.uniform(next(keys), shape, jnp.float32, -bound, bound)

    p = {}
    p['w_lin'] = u((I, H), I)                  # Linear weight (transposed)
    p['b_lin'] = u((H,), I)
    p['bn_gamma'] = jnp.ones((H,), jnp.float32)
    p['bn_beta'] = jnp.zeros((H,), jnp.float32)
    p['bn_mean'] = 0.1 * jax.random.normal(next(keys), (H,), jnp.float32)
    p['bn_var'] = 1.0 + 0.1 * jax.random.uniform(next(keys), (H,), jnp.float32)
    for l in range(NUM_LAYERS):
        in_dim = H if l == 0 else D * H
        for tag in ('f', 'b'):                 # forward / backward direction
            p[f'wih_{l}{tag}'] = u((in_dim, 4 * H), H)   # W_ih^T, [i|f|g|o]
            p[f'whh_{l}{tag}'] = u((H, 4 * H), H)        # W_hh^T (dead: h0==0)
            p[f'bih_{l}{tag}'] = u((4 * H,), H)
            p[f'bhh_{l}{tag}'] = u((4 * H,), H)
    p['ln_gamma'] = jnp.ones((D * H,), jnp.float32)
    p['ln_beta'] = jnp.zeros((D * H,), jnp.float32)
    p['fc_w'] = u((D * H, 1), D * H)
    p['fc_b'] = u((1,), D * H)
    return p


def pack_params(p):
    """Fold BN -> Linear -> layer-0 gates, fuse directions/gates, and pack
    every parameter into a single (PARAM_ROWS, GPAD) f32 slab (one DMA)."""
    # 1) eval-mode BatchNorm folded into the Linear layer.
    scale = p['bn_gamma'] * jax.lax.rsqrt(p['bn_var'] + EPS_BN)        # (H,)
    wlin = p['w_lin'] * scale[None, :]                                 # (I, H)
    blin = (p['b_lin'] - p['bn_mean']) * scale + p['bn_beta']          # (H,)

    # 2) per layer: drop W_hh (h0==0) and the forget gate (c0==0), combine
    #    b_ih + b_hh, interleave directions: columns [i_f|i_b|g_f|g_b|o_f|o_b].
    def pack_layer(l):
        ws, bs = [], []
        for gate in (0, 2, 3):                 # i, g, o (skip f)
            for tag in ('f', 'b'):
                ws.append(p[f'wih_{l}{tag}'][:, gate * H:(gate + 1) * H])
                bs.append(p[f'bih_{l}{tag}'][gate * H:(gate + 1) * H]
                          + p[f'bhh_{l}{tag}'][gate * H:(gate + 1) * H])
        return jnp.concatenate(ws, axis=1), jnp.concatenate(bs, axis=0)

    w0, b0 = pack_layer(0)                     # (H, 192), (192,)
    w1, b1 = pack_layer(1)                     # (2H, 192), (192,)

    # 3) exact fold of the (BN-folded) Linear into layer-0 gates: removes one
    #    MXU matmul from the kernel's serial dependency chain.
    w0f = wlin @ w0                            # (I, 192)
    b0f = blin @ w0 + b0                       # (192,)

    def rows2d(a):                             # pad lane axis to GPAD
        return jnp.pad(a, ((0, 0), (0, GPAD - a.shape[1])))

    def row1d(v):
        return jnp.pad(v, (0, GPAD - v.shape[0]))[None, :]

    return jnp.concatenate([
        rows2d(w0f),                                         # rows 0:16
        rows2d(w1),                                          # rows 16:80
        row1d(b0f), row1d(b1),                               # rows 80, 81
        row1d(p['ln_gamma']), row1d(p['ln_beta']),           # rows 82, 83
        row1d(p['fc_w'][:, 0]), row1d(p['fc_b']),            # rows 84, 85
        jnp.zeros((PARAM_ROWS - (B0_ROW + 6), GPAD), jnp.float32),
    ], axis=0)                                               # (88, 256)


# ----------------------------------------------------------------------------
# Pure-JAX references for verification.
# ----------------------------------------------------------------------------
def packed_reference(x, pk):
    """Mirror of the kernel math (same packing + bf16 gate operands):
    tight structural check — the only kernel-vs-this differences are
    transcendental/accumulation implementation details."""
    def layer(h, w, b_row):
        z = jnp.dot(h.astype(jnp.bfloat16), w.astype(jnp.bfloat16),
                    preferred_element_type=jnp.float32) + pk[b_row]
        i = jax.nn.sigmoid(z[:, 0:D * H])
        g = jnp.tanh(z[:, D * H:2 * D * H])
        o = jax.nn.sigmoid(z[:, 2 * D * H:3 * D * H])
        return o * jnp.tanh(i * g)

    h = layer(x, pk[0:I], B0_ROW)
    h = layer(h, pk[W1_ROW:W1_ROW + D * H], B1_ROW)
    mu = jnp.mean(h, -1, keepdims=True)
    var = jnp.mean((h - mu) ** 2, -1, keepdims=True)
    h = (h - mu) * jax.lax.rsqrt(var + EPS_LN)
    h = h * pk[LN_G_ROW, 0:D * H] + pk[LN_B_ROW, 0:D * H]
    h = jnp.maximum(h, 0.0)
    return h @ pk[FC_W_ROW, 0:D * H][:, None] + pk[FC_B_ROW, 0]


def reference_forward(x, p):
    """Exact f32 re-statement of the original module math (eval mode)."""
    y = x @ p['w_lin'] + p['b_lin']
    y = (y - p['bn_mean']) / jnp.sqrt(p['bn_var'] + EPS_BN) * p['bn_gamma'] + p['bn_beta']

    def cell(xx, l, tag):
        h0 = jnp.zeros((xx.shape[0], H), jnp.float32)
        c0 = jnp.zeros((xx.shape[0], H), jnp.float32)
        g = (xx @ p[f'wih_{l}{tag}'] + h0 @ p[f'whh_{l}{tag}']
             + p[f'bih_{l}{tag}'] + p[f'bhh_{l}{tag}'])
        i = jax.nn.sigmoid(g[:, 0:H])
        f = jax.nn.sigmoid(g[:, H:2 * H])
        gg = jnp.tanh(g[:, 2 * H:3 * H])
        o = jax.nn.sigmoid(g[:, 3 * H:4 * H])
        c = f * c0 + i * gg
        return o * jnp.tanh(c)

    h = y                                        # seq_len == 1 after unsqueeze
    for l in range(NUM_LAYERS):
        h = jnp.concatenate([cell(h, l, 'f'), cell(h, l, 'b')], axis=-1)

    mu = jnp.mean(h, -1, keepdims=True)
    var = jnp.mean((h - mu) ** 2, -1, keepdims=True)
    h = (h - mu) / jnp.sqrt(var + EPS_LN) * p['ln_gamma'] + p['ln_beta']
    h = jnp.maximum(h, 0.0)                      # dropout=identity, act=relu
    return h @ p['fc_w'] + p['fc_b']


if __name__ == "__main__":
    key = jax.random.PRNGKey(0)
    kx, kp = jax.random.split(key)
    x = jax.random.normal(kx, (B, I), jnp.float32)
    params = init_params(kp)
    slab = pack_params(params)

    out = jax.block_until_ready(lstm_model_forward(x, slab))
    assert out.shape == (B, 1), out.shape

    # Tight structural check vs a bf16-matched pure-JAX mirror of the kernel.
    ref_packed = jax.block_until_ready(packed_reference(x, slab))
    np.testing.assert_allclose(np.asarray(out), np.asarray(ref_packed),
                               atol=5e-4, rtol=5e-4)

    # End-to-end check vs exact f32 module math; the widened tolerance covers
    # the bf16 gate operands adopted per the performance review (f32 operands
    # matched at 2e-3 in v2).
    ref = jax.block_until_ready(reference_forward(x, params))
    np.testing.assert_allclose(np.asarray(out), np.asarray(ref),
                               atol=2e-2, rtol=2e-2)

    print("KERNEL_OK")
</pallas_src>

<mosaic_0001>
module attributes {stable_mosaic.version = 11 : i64} {
  func.func @lstm_model_kernel(%arg0: i32, %arg1: memref<8x16xf32, #tpu.memory_space<vmem>>, %arg2: memref<88x256xf32, #tpu.memory_space<vmem>>, %arg3: memref<8x1xf32, #tpu.memory_space<vmem>>) attributes {dimension_semantics = [#tpu.dimension_semantics<parallel>], iteration_bounds = array<i64: 1>, scalar_prefetch = 0 : i64, scratch_operands = 0 : i64, tpu.core_type = #tpu.core_type<tc>, window_params = [{transform_indices = @transform_0, window_bounds = array<i64: 8, 16>}, {pipeline_mode = #tpu.pipeline_mode<synchronous>, transform_indices = @transform_1, window_bounds = array<i64: 88, 256>}, {transform_indices = @transform_2, window_bounds = array<i64: 8, 1>}]} {
    %c0 = arith.constant 0 : index
    %c0_0 = arith.constant 0 : index
    %0 = vector.load %arg2[%c0, %c0_0] : memref<88x256xf32, #tpu.memory_space<vmem>>, vector<16x256xf32>
    %1 = arith.truncf %0 : vector<16x256xf32> to vector<16x256xbf16>
    %c16 = arith.constant 16 : index
    %c0_1 = arith.constant 0 : index
    %2 = vector.load %arg2[%c16, %c0_1] : memref<88x256xf32, #tpu.memory_space<vmem>>, vector<64x256xf32>
    %3 = arith.truncf %2 : vector<64x256xf32> to vector<64x256xbf16>
    %4 = tpu.iota {dimensions = array<i32: 1>} : vector<8x256xi32>
    %c64_i32 = arith.constant 64 : i32
    %5 = vector.broadcast %c64_i32 : i32 to vector<8x256xi32>
    %6 = arith.cmpi sge, %4, %5 : vector<8x256xi32>
    %c128_i32 = arith.constant 128 : i32
    %7 = vector.broadcast %c128_i32 : i32 to vector<8x256xi32>
    %8 = arith.cmpi slt, %4, %7 : vector<8x256xi32>
    %9 = arith.andi %6, %8 : vector<8x256xi1>
    %c0_2 = arith.constant 0 : index
    %c0_3 = arith.constant 0 : index
    %10 = vector.load %arg1[%c0_2, %c0_3] : memref<8x16xf32, #tpu.memory_space<vmem>>, vector<8x16xf32>
    %11 = arith.truncf %10 : vector<8x16xf32> to vector<8x16xbf16>
    %c80 = arith.constant 80 : index
    %c0_4 = arith.constant 0 : index
    %12 = vector.load %arg2[%c80, %c0_4] : memref<88x256xf32, #tpu.memory_space<vmem>>, vector<1x256xf32>
    %cst = arith.constant dense<0.000000e+00> : vector<8x256xf32>
    %13 = tpu.matmul %11, %1, %cst {dimension_numbers = #tpu.dot_dimension_numbers<[1], [0], [0], [1], [0, 0, 1, 1], [], []>} : vector<8x16xbf16>, vector<16x256xbf16>, vector<8x256xf32> -> vector<8x256xf32>
    %14 = vector.broadcast %12 : vector<1x256xf32> to vector<8x256xf32>
    %15 = arith.addf %13, %14 : vector<8x256xf32>
    %cst_5 = arith.constant 5.000000e-01 : f32
    %16 = vector.broadcast %cst_5 : f32 to vector<8x256xf32>
    %17 = arith.mulf %16, %15 : vector<8x256xf32>
    %18 = arith.select %9, %15, %17 : vector<8x256xi1>, vector<8x256xf32>
    %19 = math.tanh %18 : vector<8x256xf32>
    %cst_6 = arith.constant 1.000000e+00 : f32
    %20 = vector.broadcast %cst_6 : f32 to vector<8x256xf32>
    %21 = arith.addf %19, %20 : vector<8x256xf32>
    %cst_7 = arith.constant 5.000000e-01 : f32
    %22 = vector.broadcast %cst_7 : f32 to vector<8x256xf32>
    %23 = arith.mulf %22, %21 : vector<8x256xf32>
    %24 = arith.select %9, %19, %23 : vector<8x256xi1>, vector<8x256xf32>
    %25 = vector.extract_strided_slice %24 {offsets = [0, 0], sizes = [8, 64], strides = [1, 1]} : vector<8x256xf32> to vector<8x64xf32>
    %26 = vector.extract_strided_slice %24 {offsets = [0, 64], sizes = [8, 64], strides = [1, 1]} : vector<8x256xf32> to vector<8x64xf32>
    %27 = vector.extract_strided_slice %24 {offsets = [0, 128], sizes = [8, 64], strides = [1, 1]} : vector<8x256xf32> to vector<8x64xf32>
    %28 = arith.mulf %25, %26 : vector<8x64xf32>
    %29 = math.tanh %28 : vector<8x64xf32>
    %30 = arith.mulf %27, %29 : vector<8x64xf32>
    %31 = arith.truncf %30 : vector<8x64xf32> to vector<8x64xbf16>
    %c81 = arith.constant 81 : index
    %c0_8 = arith.constant 0 : index
    %32 = vector.load %arg2[%c81, %c0_8] : memref<88x256xf32, #tpu.memory_space<vmem>>, vector<1x256xf32>
    %cst_9 = arith.constant dense<0.000000e+00> : vector<8x256xf32>
    %33 = tpu.matmul %31, %3, %cst_9 {dimension_numbers = #tpu.dot_dimension_numbers<[1], [0], [0], [1], [0, 0, 1, 1], [], []>} : vector<8x64xbf16>, vector<64x256xbf16>, vector<8x256xf32> -> vector<8x256xf32>
    %34 = vector.broadcast %32 : vector<1x256xf32> to vector<8x256xf32>
    %35 = arith.addf %33, %34 : vector<8x256xf32>
    %cst_10 = arith.constant 5.000000e-01 : f32
    %36 = vector.broadcast %cst_10 : f32 to vector<8x256xf32>
    %37 = arith.mulf %36, %35 : vector<8x256xf32>
    %38 = arith.select %9, %35, %37 : vector<8x256xi1>, vector<8x256xf32>
    %39 = math.tanh %38 : vector<8x256xf32>
    %cst_11 = arith.constant 1.000000e+00 : f32
    %40 = vector.broadcast %cst_11 : f32 to vector<8x256xf32>
    %41 = arith.addf %39, %40 : vector<8x256xf32>
    %cst_12 = arith.constant 5.000000e-01 : f32
    %42 = vector.broadcast %cst_12 : f32 to vector<8x256xf32>
    %43 = arith.mulf %42, %41 : vector<8x256xf32>
    %44 = arith.select %9, %39, %43 : vector<8x256xi1>, vector<8x256xf32>
    %45 = vector.extract_strided_slice %44 {offsets = [0, 0], sizes = [8, 64], strides = [1, 1]} : vector<8x256xf32> to vector<8x64xf32>
    %46 = vector.extract_strided_slice %44 {offsets = [0, 64], sizes = [8, 64], strides = [1, 1]} : vector<8x256xf32> to vector<8x64xf32>
    %47 = vector.extract_strided_slice %44 {offsets = [0, 128], sizes = [8, 64], strides = [1, 1]} : vector<8x256xf32> to vector<8x64xf32>
    %48 = arith.mulf %45, %46 : vector<8x64xf32>
    %49 = math.tanh %48 : vector<8x64xf32>
    %50 = arith.mulf %47, %49 : vector<8x64xf32>
    %cst_13 = arith.constant dense<0.000000e+00> : vector<8xf32>
    %51 = vector.multi_reduction <add>, %50, %cst_13 [1] : vector<8x64xf32> to vector<8xf32>
    %52 = vector.shape_cast %51 : vector<8xf32> to vector<8x1xf32>
    %cst_14 = arith.constant 6.400000e+01 : f32
    %53 = vector.broadcast %cst_14 : f32 to vector<8x1xf32>
    %54 = arith.divf %52, %53 : vector<8x1xf32>
    %55 = vector.broadcast %54 : vector<8x1xf32> to vector<8x64xf32>
    %56 = arith.subf %50, %55 : vector<8x64xf32>
    %57 = vector.broadcast %54 : vector<8x1xf32> to vector<8x64xf32>
    %58 = arith.subf %50, %57 : vector<8x64xf32>
    %59 = arith.mulf %56, %58 : vector<8x64xf32>
    %cst_15 = arith.constant dense<0.000000e+00> : vector<8xf32>
    %60 = vector.multi_reduction <add>, %59, %cst_15 [1] : vector<8x64xf32> to vector<8xf32>
    %61 = vector.shape_cast %60 : vector<8xf32> to vector<8x1xf32>
    %cst_16 = arith.constant 6.400000e+01 : f32
    %62 = vector.broadcast %cst_16 : f32 to vector<8x1xf32>
    %63 = arith.divf %61, %62 : vector<8x1xf32>
    %64 = vector.broadcast %54 : vector<8x1xf32> to vector<8x64xf32>
    %65 = arith.subf %50, %64 : vector<8x64xf32>
    %cst_17 = arith.constant 9.99999974E-6 : f32
    %66 = vector.broadcast %cst_17 : f32 to vector<8x1xf32>
    %67 = arith.addf %63, %66 : vector<8x1xf32>
    %68 = math.rsqrt %67 : vector<8x1xf32>
    %69 = vector.broadcast %68 : vector<8x1xf32> to vector<8x64xf32>
    %70 = arith.mulf %65, %69 : vector<8x64xf32>
    %c82 = arith.constant 82 : index
    %c0_18 = arith.constant 0 : index
    %71 = vector.load %arg2[%c82, %c0_18] : memref<88x256xf32, #tpu.memory_space<vmem>>, vector<1x64xf32>
    %72 = vector.broadcast %71 : vector<1x64xf32> to vector<8x64xf32>
    %73 = arith.mulf %70, %72 : vector<8x64xf32>
    %c83 = arith.constant 83 : index
    %c0_19 = arith.constant 0 : index
    %74 = vector.load %arg2[%c83, %c0_19] : memref<88x256xf32, #tpu.memory_space<vmem>>, vector<1x64xf32>
    %75 = vector.broadcast %74 : vector<1x64xf32> to vector<8x64xf32>
    %76 = arith.addf %73, %75 : vector<8x64xf32>
    %cst_20 = arith.constant 0.000000e+00 : f32
    %77 = vector.broadcast %cst_20 : f32 to vector<8x64xf32>
    %78 = arith.maximumf %76, %77 : vector<8x64xf32>
    %c84 = arith.constant 84 : index
    %c0_21 = arith.constant 0 : index
    %79 = vector.load %arg2[%c84, %c0_21] : memref<88x256xf32, #tpu.memory_space<vmem>>, vector<1x64xf32>
    %80 = vector.broadcast %79 : vector<1x64xf32> to vector<8x64xf32>
    %81 = arith.mulf %78, %80 : vector<8x64xf32>
    %cst_22 = arith.constant dense<0.000000e+00> : vector<8xf32>
    %82 = vector.multi_reduction <add>, %81, %cst_22 [1] : vector<8x64xf32> to vector<8xf32>
    %83 = vector.shape_cast %82 : vector<8xf32> to vector<8x1xf32>
    %c85 = arith.constant 85 : index
    %c0_23 = arith.constant 0 : index
    %84 = vector.load %arg2[%c85, %c0_23] : memref<88x256xf32, #tpu.memory_space<vmem>>, vector<1x1xf32>
    %85 = vector.broadcast %84 : vector<1x1xf32> to vector<8x1xf32>
    %86 = arith.addf %83, %85 : vector<8x1xf32>
    %c0_24 = arith.constant 0 : index
    %c0_25 = arith.constant 0 : index
    %87 = vector.load %arg3[%c0_24, %c0_25] : memref<8x1xf32, #tpu.memory_space<vmem>>, vector<8x1xf32>
    tpu.vector_store %arg3[%c0_24, %c0_25], %86 {strides = array<i32>} : memref<8x1xf32, #tpu.memory_space<vmem>>, vector<8x1xf32>,
    return
  }
  func.func @transform_0(%arg0: i32) -> (i32, i32) {
    %c0_i32 = arith.constant 0 : i32
    %c0_i32_0 = arith.constant 0 : i32
    return %arg0, %c0_i32 : i32, i32
  }
  func.func @transform_1(%arg0: i32) -> (i32, i32) {
    %c0_i32 = arith.constant 0 : i32
    %c0_i32_0 = arith.constant 0 : i32
    %c0_i32_1 = arith.constant 0 : i32
    return %c0_i32, %c0_i32_0 : i32, i32
  }
  func.func @transform_2(%arg0: i32) -> (i32, i32) {
    %c0_i32 = arith.constant 0 : i32
    %c0_i32_0 = arith.constant 0 : i32
    return %arg0, %c0_i32 : i32, i32
  }
}

</mosaic_0001>

<llo_original>
// kernel: tpu_custom_call.1
$region0: #{tpu_custom_call.1}
  #allocation0 [shape = 'u32[]', space=smem, size = 0x4, offset = 0x4, fixed_abs, tag = 'smem constant byte address 0x4 - core index']
  #allocation1 [shape = 'u32[144,128]{1,0:T(1,128)}', space=vmem, size = 0x12000, scoped, tag = 'internal scratch']
  %s0 = inlined_call_operand.hbm [shape: f32[8,16], index: 0, kind: input, shape index: {}]
  %s1 = inlined_call_operand.hbm [shape: f32[88,256], index: 1, kind: input, shape index: {}]
  %s2 = inlined_call_operand.vmem [shape: f32[8,1], index: 2, kind: output, shape index: {}]
  %s3 = sld [smem:[#allocation0]]
  $region26: #{tpu_custom_call.1} parent=0
    _
  %s5 = ssub.s32 1, %s3
  %s6 = scalar_select 0, %s5, %s3
  $region1: #{tpu_custom_call.1} parent=0
    #allocation2 [shape = 'u8[4096]{0}', space=vmem, size = 0x1000, scoped, tag = 'input window, operand 0, single buffered']
    #allocation3 [shape = 's32[1]{0}', space=sflag, size = 0x4, scoped, tag = 'scoped memory for tpu_custom_call.1']
    #allocation4 [shape = 'u8[90112]{0}', space=vmem, size = 0x16000, scoped, tag = 'input window, operand 1, single buffered']
    #allocation5 [shape = 's32[1]{0}', space=sflag, size = 0x4, scoped, tag = 'scoped memory for tpu_custom_call.1']
    %7 = vsyncpa [#allocation3], 0
    %8 = vsyncpa [#allocation5], 0
    // Predicated region
    $region2: #{tpu_custom_call.1} parent=1 // pred_check
      _
    $region3: #{tpu_custom_call.1} parent=1 // pred_check_branch
      %10 = sbr.rel (0) target = $region5
    $region4: #{tpu_custom_call.1} parent=1 // pred_region
      %s12 = ssub.s32 128, 128
      %13 = vsyncadd [#allocation3], %s12
      %s15 = sshll.u32 [#allocation2], 4
      %s16 = int_to_ptr.vmem [resolvable:$true] %s15
      %18 = dma.hbm_to_vmem [thread:$0]  %s0, 128, %s16, [#allocation3]
    $region5: #{tpu_custom_call.1} parent=1 // pred_fallthru
      _
    // Predicated region
    $region6: #{tpu_custom_call.1} parent=1 // pred_check
      _
    $region7: #{tpu_custom_call.1} parent=1 // pred_check_branch
      %20 = sbr.rel (0) target = $region9
    $region8: #{tpu_custom_call.1} parent=1 // pred_region
      %s22 = ssub.s32 2816, 2816
      %23 = vsyncadd [#allocation5], %s22
      %s24 = sshll.u32 [#allocation4], 4
      %s25 = int_to_ptr.vmem [resolvable:$true] %s24
      %30 = dma.hbm_to_vmem [thread:$0]  %s1, 2816, %s25, [#allocation5], 256, 256, 16
    $region9: #{tpu_custom_call.1} parent=1 // pred_fallthru
      _
    // Predicated region
    $region10: #{tpu_custom_call.1} parent=1 // pred_check
      _
    $region11: #{tpu_custom_call.1} parent=1 // pred_check_branch
      %32 = sbr.rel (0) target = $region13
    $region12: #{tpu_custom_call.1} parent=1 // pred_region
      %33 = dma.done [#allocation3], 128
    $region13: #{tpu_custom_call.1} parent=1 // pred_fallthru
      _
    // Predicated region
    $region14: #{tpu_custom_call.1} parent=1 // pred_check
      _
    $region15: #{tpu_custom_call.1} parent=1 // pred_check_branch
      %35 = sbr.rel (0) target = $region17
    $region16: #{tpu_custom_call.1} parent=1 // pred_region
      %36 = dma.done [#allocation5], 2816
    $region17: #{tpu_custom_call.1} parent=1 // pred_fallthru
      _
    %v38 = vld [vmem:[#allocation4] sm:$0xff]
    %v39 = vld [vmem:[#allocation4 + $0x8] sm:$0xff]
    %v40 = vld [vmem:[#allocation4 + $0x10] sm:$0xff]
    %v41 = vld [vmem:[#allocation4 + $0x18] sm:$0xff]
    %v42 = vpack.c.bf16 %v40, %v38
    %v43 = vpack.c.bf16 %v41, %v39
    %v44 = vld [vmem:[#allocation4 + $0x20] sm:$0xff]
    %v45 = vld [vmem:[#allocation4 + $0x28] sm:$0xff]
    %v46 = vld [vmem:[#allocation4 + $0x30] sm:$0xff]
    %v47 = vld [vmem:[#allocation4 + $0x38] sm:$0xff]
    %v48 = vld [vmem:[#allocation4 + $0x40] sm:$0xff]
    %v49 = vld [vmem:[#allocation4 + $0x48] sm:$0xff]
    %v50 = vld [vmem:[#allocation4 + $0x50] sm:$0xff]
    %v51 = vld [vmem:[#allocation4 + $0x58] sm:$0xff]
    %v52 = vld [vmem:[#allocation4 + $0x60] sm:$0xff]
    %v53 = vld [vmem:[#allocation4 + $0x68] sm:$0xff]
    %v54 = vld [vmem:[#allocation4 + $0x70] sm:$0xff]
    %v55 = vld [vmem:[#allocation4 + $0x78] sm:$0xff]
    %v56 = vld [vmem:[#allocation4 + $0x80] sm:$0xff]
    %v57 = vld [vmem:[#allocation4 + $0x88] sm:$0xff]
    %v58 = vld [vmem:[#allocation4 + $0x90] sm:$0xff]
    %v59 = vld [vmem:[#allocation4 + $0x98] sm:$0xff]
    %v60 = vpack.c.bf16 %v46, %v44
    %v61 = vpack.c.bf16 %v47, %v45
    %v62 = vpack.c.bf16 %v50, %v48
    %v63 = vpack.c.bf16 %v51, %v49
    %v64 = vpack.c.bf16 %v54, %v52
    %v65 = vpack.c.bf16 %v55, %v53
    %v66 = vpack.c.bf16 %v58, %v56
    %v67 = vpack.c.bf16 %v59, %v57
    %v68 = vlaneseq
    %v69 = vand.u32 %v68, 127
    %v70 = vadd.s32 %v69, 128
    %vm71 = vcmp.ge.s32.totalorder %v69, 64
    %vm72 = vcmp.ge.s32.totalorder %v70, 64
    %vm73 = vcmp.lt.s32.totalorder %v69, 128
    %vm74 = vcmp.lt.s32.totalorder %v70, 128
    %vm75 = vmand %vm71, %vm73
    %vm76 = vmand %vm72, %vm74
    %v77 = vld [vmem:[#allocation2] sm:$0xff]
    %v78 = vpack.c.bf16 %v77, %v77
    %s79 = scalar_lea.vmem [#allocation4], 160
    %v80 = vld [vmem:[%s79] ss:$8 sm:$0x3]
    %v82 = vlaneseq
    %v83 = vshrl.u32 %v82, 7
    %v84 = vsub.s32 0, %v83
    %v85 = vrot.slane %v80, %v84
    %v86 = vlaneseq
    %v87 = vshrl.u32 %v86, 7
    %v88 = vsub.s32 1, %v87
    %v89 = vrot.slane %v80, %v88
    %vm92 = vcmask 130048
    %v94 = vsel %vm92, %v78, 0
    %96 = vmatprep.subr.bf16.mxu0 %v43
    %97 = vmatpush1.bf16.msra.mxu0 %v42
    %98 = vmatprep.subr.bf16.mxu0 0
    %99 = vmatpush1.bf16.msra.mxu0 0
    %100 = vmatprep.subr.bf16.mxu0 0
    %101 = vmatpush1.bf16.msra.mxu0 0
    %102 = vmatprep.subr.bf16.mxu0 0
    %103 = vmatpush1.bf16.msra.mxu0 0
    %104 = vmatprep.subr.bf16.mxu0 0
    %105 = vmatpush1.bf16.msra.mxu0 0
    %106 = vmatprep.subr.bf16.mxu0 0
    %107 = vmatpush1.bf16.msra.mxu0 0
    %108 = vmatprep.subr.bf16.mxu0 0
    %109 = vmatpush1.bf16.msra.mxu0 0
    %110 = vmatprep.subr.bf16.mxu0 0
    %111 = vmatpush1.bf16.msra.mxu0 0
    %112 = vmatprep.subr.bf16.mxu0 0
    %113 = vmatpush1.bf16.msra.mxu0 0
    %114 = vmatprep.subr.bf16.mxu0 0
    %115 = vmatpush1.bf16.msra.mxu0 0
    %116 = vmatprep.subr.bf16.mxu0 0
    %117 = vmatpush1.bf16.msra.mxu0 0
    %118 = vmatprep.subr.bf16.mxu0 0
    %119 = vmatpush1.bf16.msra.mxu0 0
    %120 = vmatprep.subr.bf16.mxu0 0
    %121 = vmatpush1.bf16.msra.mxu0 0
    %122 = vmatprep.subr.bf16.mxu0 0
    %123 = vmatpush1.bf16.msra.mxu0 0
    %124 = vmatprep.subr.bf16.mxu0 0
    %125 = vmatpush1.bf16.msra.mxu0 0
    %126 = vmatprep.subr.bf16.mxu0 0
    %127 = vmatpush1.bf16.msra.mxu0 0
    %128 = vmatprep.mubr.bf16.mxu0 0
    %129 = vmatmul.mubr.bf16.gmra.mrb[0].mxu0 %v94
    %v130 = vpop.f32.mrb[0].mxu0
    %v131 = vadd.f32 %v85, %v130
    %v132 = vpop.f32.mrb[0].mxu0
    %v133 = vadd.f32 %v89, %v132
    %v134 = vpop.f32.mrb[0].mxu0
    %v135 = vpop.f32.mrb[0].mxu0
    %136 = vdwg.mxu0
    %v137 = vmul.f32 %v131, 0.5
    %v138 = vmul.f32 %v133, 0.5
    %v139 = vsel %vm75, %v131, %v137
    %v140 = vsel %vm76, %v133, %v138
    %v141 = vtanh.pop %v139
    %v142 = vtanh.pop %v140
    %v143 = vadd.f32 %v141, 1.0
    %v144 = vadd.f32 %v142, 1.0
    %v145 = vmul.f32 %v143, 0.5
    %v146 = vmul.f32 %v144, 0.5
    %v147 = vsel %vm75, %v141, %v145
    %v148 = vsel %vm76, %v142, %v146
    %150 = vrot.lane.b32.xlu0 %v147, 64
    %v151 = vpop.permute.xlu0 %150
    %v153 = vmul.f32 %v147, %v151
    %v154 = vtanh.pop %v153
    %v155 = vmul.f32 %v148, %v154
    %v156 = vpack.c.bf16 %v155, %v155
    %s157 = scalar_lea.vmem [#allocation4], 161
    %v158 = vld [vmem:[%s157] ss:$8 sm:$0x3]
    %v160 = vlaneseq
    %v161 = vshrl.u32 %v160, 7
    %v162 = vsub.s32 0, %v161
    %v163 = vrot.slane %v158, %v162
    %v164 = vlaneseq
    %v165 = vshrl.u32 %v164, 7
    %v166 = vsub.s32 1, %v165
    %v167 = vrot.slane %v158, %v166
    %vm170 = vcmask 523264
    %v172 = vsel %vm170, %v156, 0
    %174 = vmatprep.subr.bf16.mxu0 %v61
    %175 = vmatpush1.bf16.msra.mxu0 %v60
    %176 = vmatprep.subr.bf16.mxu0 %v63
    %177 = vmatpush1.bf16.msra.mxu0 %v62
    %178 = vmatprep.subr.bf16.mxu0 %v65
    %179 = vmatpush1.bf16.msra.mxu0 %v64
    %180 = vmatprep.subr.bf16.mxu0 %v67
    %181 = vmatpush1.bf16.msra.mxu0 %v66
    %182 = vmatprep.subr.bf16.mxu0 0
    %183 = vmatpush1.bf16.msra.mxu0 0
    %184 = vmatprep.subr.bf16.mxu0 0
    %185 = vmatpush1.bf16.msra.mxu0 0
    %186 = vmatprep.subr.bf16.mxu0 0
    %187 = vmatpush1.bf16.msra.mxu0 0
    %188 = vmatprep.subr.bf16.mxu0 0
    %189 = vmatpush1.bf16.msra.mxu0 0
    %190 = vmatprep.subr.bf16.mxu0 0
    %191 = vmatpush1.bf16.msra.mxu0 0
    %192 = vmatprep.subr.bf16.mxu0 0
    %193 = vmatpush1.bf16.msra.mxu0 0
    %194 = vmatprep.subr.bf16.mxu0 0
    %195 = vmatpush1.bf16.msra.mxu0 0
    %196 = vmatprep.subr.bf16.mxu0 0
    %197 = vmatpush1.bf16.msra.mxu0 0
    %198 = vmatprep.subr.bf16.mxu0 0
    %199 = vmatpush1.bf16.msra.mxu0 0
    %200 = vmatprep.subr.bf16.mxu0 0
    %201 = vmatpush1.bf16.msra.mxu0 0
    %202 = vmatprep.subr.bf16.mxu0 0
    %203 = vmatpush1.bf16.msra.mxu0 0
    %204 = vmatprep.subr.bf16.mxu0 0
    %205 = vmatpush1.bf16.msra.mxu0 0
    %206 = vmatprep.mubr.bf16.mxu0 0
    %207 = vmatmul.mubr.bf16.gmra.mrb[0].mxu0 %v172
    %v208 = vpop.f32.mrb[0].mxu0
    %v209 = vadd.f32 %v163, %v208
    %v210 = vpop.f32.mrb[0].mxu0
    %v211 = vadd.f32 %v167, %v210
    %v212 = vpop.f32.mrb[0].mxu0
    %v213 = vpop.f32.mrb[0].mxu0
    %214 = vdwg.mxu0
    %v215 = vmul.f32 %v209, 0.5
    %v216 = vmul.f32 %v211, 0.5
    %v217 = vsel %vm75, %v209, %v215
    %v218 = vsel %vm76, %v211, %v216
    %v219 = vtanh.pop %v217
    %v220 = vtanh.pop %v218
    %v221 = vadd.f32 %v219, 1.0
    %v222 = vadd.f32 %v220, 1.0
    %v223 = vmul.f32 %v221, 0.5
    %v224 = vmul.f32 %v222, 0.5
    %v225 = vsel %vm75, %v219, %v223
    %v226 = vsel %vm76, %v220, %v224
    %228 = vrot.lane.b32.xlu0 %v225, 64
    %v229 = vpop.permute.xlu0 %228
    %v231 = vmul.f32 %v225, %v229
    %v232 = vtanh.pop %v231
    %v233 = vmul.f32 %v226, %v232
    %v234 = vsel %vm170, %v233, 0.0
    %235 = vadd.xlane.f32.xlu0 %v234
    %v236 = vpop.xlane.xlu0 %235
    %v237 = vrcp.pop 64.0
    %v238 = vmul.f32 %v236, %v237
    %v239 = vsub.f32 %v233, %v238
    %v240 = vmul.f32 %v239, %v239
    %v241 = vsel %vm170, %v240, 0.0
    %242 = vadd.xlane.f32.xlu0 %v241
    %v243 = vpop.xlane.xlu0 %242
    %v244 = vmul.f32 %v243, %v237
    %v245 = vadd.f32 %v244, 1e-05
    %v246 = vrsqrt.pop %v245
    %v247 = vmul.f32 %v239, %v246
    %v248 = vld [vmem:[#allocation4 + $0xa2] ss:$0 sm:$0xff]
    %v249 = vmul.f32 %v247, %v248
    %v250 = vld [vmem:[#allocation4 + $0xa3] ss:$0 sm:$0xff]
    %v251 = vadd.f32 %v249, %v250
    %v252 = vmax.f32 %v251, 0.0
    %v253 = vld [vmem:[#allocation4 + $0xa4] ss:$0 sm:$0xff]
    %v254 = vmul.f32 %v252, %v253
    %v255 = vsel %vm170, %v254, 0.0
    %256 = vadd.xlane.f32.xlu0 %v255
    %v257 = vpop.xlane.xlu0 %256
    %v258 = vld [vmem:[#allocation4 + $0xa5] ss:$0 sm:$0xff]
    %v259 = vadd.f32 %v257, %v258
    %vm260 = vcmask 7168
    %261 = vst.msk [vmem:[%s2] sm:$0xff] %vm260, %v259
    // Predicated region
    $region18: #{tpu_custom_call.1} parent=1 // pred_check
      _
    $region19: #{tpu_custom_call.1} parent=1 // pred_check_branch
      %263 = sbr.rel (0) target = $region21
    $region20: #{tpu_custom_call.1} parent=1 // pred_region
      _
    $region21: #{tpu_custom_call.1} parent=1 // pred_fallthru
      _
    // Predicated region
    $region22: #{tpu_custom_call.1} parent=1 // pred_check
      _
    $region23: #{tpu_custom_call.1} parent=1 // pred_check_branch
      %265 = sbr.rel (0) target = $region25
    $region24: #{tpu_custom_call.1} parent=1 // pred_region
      _
    $region25: #{tpu_custom_call.1} parent=1 // pred_fallthru
      _
    %266 = vsyncpa [#allocation3], 1
    %267 = vsyncpa [#allocation5], 1

</llo_original>
